<compile_context>
chip_gen: v6e
topology: v6e:2x2x1
jax: 0.10.0
libtpu: 0.0.40
codegen_flags: <defaults>
</compile_context>

<pallas_src>
import jax
import jax.numpy as jnp
from jax.experimental import pallas as pl
from jax.experimental.pallas import tpu as pltpu

LANE = 128       # lane width of a vreg
SUBLANE = 8      # sublane height of a vreg
MAX_TR = 1024    # max sublane-rows per tile (x block = Cin*1024*128*4 B)


def _round_up(a, b):
    return ((a + b - 1) // b) * b


def _make_minmax_kernel(cin, cout, tr, hw, needs_mask):
    """Pass 1: per-tile elementwise min/max partials of conv+BN+PReLU."""

    def kernel(x_ref, w_ref, b_ref, alpha_ref, pmin_ref, pmax_ref):
        alpha = alpha_ref[0]
        # Hoist the Cin tile loads; reuse them for every output channel.
        xc = [x_ref[0, c] for c in range(cin)]            # each (tr, LANE)
        zmin = None
        zmax = None
        for o in range(cout):
            z = xc[0] * w_ref[o * cin + 0]
            for c in range(1, cin):
                z = z + xc[c] * w_ref[o * cin + c]
            z = z + b_ref[o]
            z = jnp.where(z > 0, z, alpha * z)            # PReLU (shared alpha)
            zmin = z if zmin is None else jnp.minimum(zmin, z)
            zmax = z if zmax is None else jnp.maximum(zmax, z)

        if needs_mask:
            # Mask the ragged tail so garbage in partial blocks / padded lanes
            # cannot affect the global min/max.
            j = pl.program_id(1)
            row = jax.lax.broadcasted_iota(jnp.int32, (tr, LANE), 0)
            if hw % LANE == 0:
                valid = (j * tr + row) < (hw // LANE)
            else:
                lane = jax.lax.broadcasted_iota(jnp.int32, (tr, LANE), 1)
                valid = (j * tr + row) * LANE + lane < hw
            zmin = jnp.where(valid, zmin, jnp.inf)
            zmax = jnp.where(valid, zmax, -jnp.inf)

        if tr % SUBLANE == 0:
            # Fold (tr,128) -> (8,128) with pure elementwise (VPU) min/max.
            pmin_ref[0, 0] = jnp.min(
                zmin.reshape(tr // SUBLANE, SUBLANE, LANE), axis=0)
            pmax_ref[0, 0] = jnp.max(
                zmax.reshape(tr // SUBLANE, SUBLANE, LANE), axis=0)
        else:
            # Tiny-R case (tr == R < 8): store the (tr,128) partial directly.
            pmin_ref[0, 0] = zmin
            pmax_ref[0, 0] = zmax

    return kernel


def _make_norm_kernel(cin, cout):
    """Pass 2: recompute conv+BN+PReLU from x, apply (z - mn) * inv."""

    def kernel(x_ref, w_ref, b_ref, misc_ref, o_ref):
        alpha = misc_ref[0]
        mn = misc_ref[1]
        inv = misc_ref[2]
        xc = [x_ref[0, c] for c in range(cin)]            # hoisted Cin loads
        for o in range(cout):
            z = xc[0] * w_ref[o * cin + 0]
            for c in range(1, cin):
                z = z + xc[c] * w_ref[o * cin + c]
            z = z + b_ref[o]
            z = jnp.where(z > 0, z, alpha * z)
            o_ref[0, o] = ((z - mn) * inv).astype(o_ref.dtype)

    return kernel


def out_conv_forward(x, conv_w, conv_b, bn_gamma, bn_beta, bn_mean, bn_var,
                     prelu_a, eps=1e-5):
    """x: (N, Cin, H, W) NCHW float32. Returns (N, Cout, H, W)."""
    N, Cin, H, W = x.shape
    Cout = conv_w.shape[0]                       # torch weight (Cout, Cin, 1, 1)
    HW = H * W

    # Fold conv bias + eval-mode BatchNorm into per-channel weight/bias.
    # TODO(synk): training-mode BatchNorm (batch statistics) not implemented;
    #             eval-mode running-stats semantics are used instead.
    scale = (bn_gamma / jnp.sqrt(bn_var + eps)).astype(jnp.float32)     # (Cout,)
    w_eff = (conv_w.reshape(Cout, Cin).astype(jnp.float32)
             * scale[:, None]).reshape(-1)                              # (Cout*Cin,)
    b_eff = ((conv_b.astype(jnp.float32) - bn_mean.astype(jnp.float32)) * scale
             + bn_beta.astype(jnp.float32))                             # (Cout,)
    # TODO(synk): per-channel PReLU (num_parameters=Cout) unsupported; this
    #             implements PyTorch's default single shared alpha.
    alpha = jnp.asarray(prelu_a, jnp.float32).reshape(-1)[:1]           # (1,)

    # Lane-dense per-sample layout: (N, Cin, H, W) -> (N, Cin, R, 128).
    # This is a free reshape (no HBM copy) whenever H*W % 128 == 0.
    x_flat = x.reshape(N, Cin, HW).astype(jnp.float32)
    if HW % LANE != 0:
        HW_pad = pl.cdiv(HW, LANE) * LANE        # fallback path only
        x_flat = jnp.pad(x_flat, ((0, 0), (0, 0), (0, HW_pad - HW)))
    else:
        HW_pad = HW
    R = HW_pad // LANE
    x4 = x_flat.reshape(N, Cin, R, LANE)

    # Row-tile size: multiple of 8 sublanes, never larger than R, aiming for
    # ~8 row tiles per sample, capped at MAX_TR.
    if R < SUBLANE:
        tr = R                                   # single full-dim tile
    else:
        tr = min(MAX_TR, max(SUBLANE, _round_up(pl.cdiv(R, 8), SUBLANE)))
    G = pl.cdiv(R, tr)
    P = SUBLANE if tr % SUBLANE == 0 else tr     # partial-block row count
    needs_mask = (R % tr != 0) or (HW_pad != HW)
    grid = (N, G)

    smem_spec = pl.BlockSpec(memory_space=pltpu.MemorySpace.SMEM)
    x_spec = pl.BlockSpec((1, Cin, tr, LANE), lambda n, j: (n, 0, j, 0))
    params = pltpu.CompilerParams(
        dimension_semantics=("parallel", "parallel"))

    # ---- Pass 1: global min/max via per-block (P,128) elementwise partials ----
    pmin, pmax = pl.pallas_call(
        _make_minmax_kernel(Cin, Cout, tr, HW, needs_mask),
        out_shape=(
            jax.ShapeDtypeStruct((N, G, P, LANE), jnp.float32),
            jax.ShapeDtypeStruct((N, G, P, LANE), jnp.float32),
        ),
        grid=grid,
        in_specs=[x_spec, smem_spec, smem_spec, smem_spec],
        out_specs=(
            pl.BlockSpec((1, 1, P, LANE), lambda n, j: (n, j, 0, 0)),
            pl.BlockSpec((1, 1, P, LANE), lambda n, j: (n, j, 0, 0)),
        ),
        compiler_params=params,
    )(x4, w_eff, b_eff, alpha)

    mn = jnp.min(pmin)
    mx = jnp.max(pmax)
    # NOTE: constant activation (mx == mn) divides by zero, matching the
    # PyTorch reference behavior.
    inv = jnp.float32(1.0) / (mx - mn)
    misc = jnp.stack([alpha[0], mn, inv])        # (3,) SMEM scalars

    # ---- Pass 2: recompute conv+BN+PReLU, normalize, write NCHW-layout out ----
    out4 = pl.pallas_call(
        _make_norm_kernel(Cin, Cout),
        out_shape=jax.ShapeDtypeStruct((N, Cout, R, LANE), jnp.float32),
        grid=grid,
        in_specs=[x_spec, smem_spec, smem_spec, smem_spec],
        out_specs=pl.BlockSpec((1, Cout, tr, LANE), lambda n, j: (n, 0, j, 0)),
        compiler_params=params,
    )(x4, w_eff, b_eff, misc)

    out = out4.reshape(N, Cout, HW_pad)
    if HW_pad != HW:
        out = out[:, :, :HW]                     # fallback path only
    return out.reshape(N, Cout, H, W)


def _reference(x, conv_w, conv_b, bn_gamma, bn_beta, bn_mean, bn_var,
               prelu_a, eps=1e-5):
    """Pure-JAX reference of the same semantics (NCHW)."""
    Cout, Cin = conv_w.shape[:2]
    w = conv_w.reshape(Cout, Cin)
    z = jnp.einsum('nchw,oc->nohw', x, w) + conv_b[None, :, None, None]
    z = (z - bn_mean[None, :, None, None]) / jnp.sqrt(
        bn_var[None, :, None, None] + eps)
    z = z * bn_gamma[None, :, None, None] + bn_beta[None, :, None, None]
    z = jnp.where(z > 0, z, prelu_a * z)
    return (z - z.min()) / (z.max() - z.min())


if __name__ == "__main__":
    key = jax.random.PRNGKey(0)
    k_x, k_w, k_b, k_x2 = jax.random.split(key, 4)

    N, Cin, Cout = 2, 4, 3

    # Conv2d(in=4, out=3, kernel=1) parameters (deterministic init).
    conv_w = jax.random.normal(k_w, (Cout, Cin, 1, 1), dtype=jnp.float32) * 0.5
    conv_b = jax.random.normal(k_b, (Cout,), dtype=jnp.float32) * 0.1

    # BatchNorm2d defaults (gamma=1, beta=0, running_mean=0, running_var=1).
    bn_gamma = jnp.ones((Cout,), jnp.float32)
    bn_beta = jnp.zeros((Cout,), jnp.float32)
    bn_mean = jnp.zeros((Cout,), jnp.float32)
    bn_var = jnp.ones((Cout,), jnp.float32)

    # PReLU default single parameter.
    prelu_a = jnp.float32(0.25)

    fwd = jax.jit(out_conv_forward)

    # Primary test: small shape from the module spec (free-reshape fast path).
    H, W = 16, 16
    x = jax.random.normal(k_x, (N, Cin, H, W), dtype=jnp.float32)
    out = jax.block_until_ready(
        fwd(x, conv_w, conv_b, bn_gamma, bn_beta, bn_mean, bn_var, prelu_a))
    ref = _reference(x, conv_w, conv_b, bn_gamma, bn_beta, bn_mean, bn_var,
                     prelu_a)
    assert out.shape == (N, Cout, H, W)
    assert jnp.allclose(out, ref, atol=1e-5, rtol=1e-5)

    # Secondary test: exercises multi-tile grid + ragged-tail masking path.
    H2, W2 = 64, 72                              # R = 36, tr = 8 -> partial tile
    x2 = jax.random.normal(k_x2, (N, Cin, H2, W2), dtype=jnp.float32)
    out2 = jax.block_until_ready(
        fwd(x2, conv_w, conv_b, bn_gamma, bn_beta, bn_mean, bn_var, prelu_a))
    ref2 = _reference(x2, conv_w, conv_b, bn_gamma, bn_beta, bn_mean, bn_var,
                      prelu_a)
    assert out2.shape == (N, Cout, H2, W2)
    assert jnp.allclose(out2, ref2, atol=1e-5, rtol=1e-5)

    print("KERNEL_OK")
</pallas_src>

<mosaic_0001>
module attributes {stable_mosaic.version = 11 : i64} {
  func.func @kernel(%arg0: i32, %arg1: i32, %arg2: memref<1x4x2x128xf32, #tpu.memory_space<vmem>>, %arg3: memref<12xf32, #tpu.memory_space<smem>>, %arg4: memref<3xf32, #tpu.memory_space<smem>>, %arg5: memref<1xf32, #tpu.memory_space<smem>>, %arg6: memref<1x1x2x128xf32, #tpu.memory_space<vmem>>, %arg7: memref<1x1x2x128xf32, #tpu.memory_space<vmem>>) attributes {dimension_semantics = [#tpu.dimension_semantics<parallel>, #tpu.dimension_semantics<parallel>], iteration_bounds = array<i64: 2, 1>, scalar_prefetch = 0 : i64, scratch_operands = 0 : i64, tpu.core_type = #tpu.core_type<tc>, window_params = [{transform_indices = @transform_0, window_bounds = array<i64: 1, 4, 2, 128>}, {transform_indices = @transform_1, window_bounds = array<i64: 12>}, {transform_indices = @transform_2, window_bounds = array<i64: 3>}, {transform_indices = @transform_3, window_bounds = array<i64: 1>}, {transform_indices = @transform_4, window_bounds = array<i64: 1, 1, 2, 128>}, {transform_indices = @transform_5, window_bounds = array<i64: 1, 1, 2, 128>}]} {
    %c0 = arith.constant 0 : index
    %0 = memref.load %arg5[%c0] : memref<1xf32, #tpu.memory_space<smem>>
    %c0_0 = arith.constant 0 : index
    %c0_1 = arith.constant 0 : index
    %c0_2 = arith.constant 0 : index
    %c0_3 = arith.constant 0 : index
    %1 = vector.load %arg2[%c0_0, %c0_1, %c0_2, %c0_3] : memref<1x4x2x128xf32, #tpu.memory_space<vmem>>, vector<1x1x2x128xf32>
    %2 = vector.shape_cast %1 : vector<1x1x2x128xf32> to vector<2x128xf32>
    %c0_4 = arith.constant 0 : index
    %c1 = arith.constant 1 : index
    %c0_5 = arith.constant 0 : index
    %c0_6 = arith.constant 0 : index
    %3 = vector.load %arg2[%c0_4, %c1, %c0_5, %c0_6] : memref<1x4x2x128xf32, #tpu.memory_space<vmem>>, vector<1x1x2x128xf32>
    %4 = vector.shape_cast %3 : vector<1x1x2x128xf32> to vector<2x128xf32>
    %c0_7 = arith.constant 0 : index
    %c2 = arith.constant 2 : index
    %c0_8 = arith.constant 0 : index
    %c0_9 = arith.constant 0 : index
    %5 = vector.load %arg2[%c0_7, %c2, %c0_8, %c0_9] : memref<1x4x2x128xf32, #tpu.memory_space<vmem>>, vector<1x1x2x128xf32>
    %6 = vector.shape_cast %5 : vector<1x1x2x128xf32> to vector<2x128xf32>
    %c0_10 = arith.constant 0 : index
    %c3 = arith.constant 3 : index
    %c0_11 = arith.constant 0 : index
    %c0_12 = arith.constant 0 : index
    %7 = vector.load %arg2[%c0_10, %c3, %c0_11, %c0_12] : memref<1x4x2x128xf32, #tpu.memory_space<vmem>>, vector<1x1x2x128xf32>
    %8 = vector.shape_cast %7 : vector<1x1x2x128xf32> to vector<2x128xf32>
    %c0_13 = arith.constant 0 : index
    %9 = memref.load %arg3[%c0_13] : memref<12xf32, #tpu.memory_space<smem>>
    %10 = vector.broadcast %9 : f32 to vector<2x128xf32>
    %11 = arith.mulf %2, %10 : vector<2x128xf32>
    %c1_14 = arith.constant 1 : index
    %12 = memref.load %arg3[%c1_14] : memref<12xf32, #tpu.memory_space<smem>>
    %13 = vector.broadcast %12 : f32 to vector<2x128xf32>
    %14 = arith.mulf %4, %13 : vector<2x128xf32>
    %15 = arith.addf %11, %14 : vector<2x128xf32>
    %c2_15 = arith.constant 2 : index
    %16 = memref.load %arg3[%c2_15] : memref<12xf32, #tpu.memory_space<smem>>
    %17 = vector.broadcast %16 : f32 to vector<2x128xf32>
    %18 = arith.mulf %6, %17 : vector<2x128xf32>
    %19 = arith.addf %15, %18 : vector<2x128xf32>
    %c3_16 = arith.constant 3 : index
    %20 = memref.load %arg3[%c3_16] : memref<12xf32, #tpu.memory_space<smem>>
    %21 = vector.broadcast %20 : f32 to vector<2x128xf32>
    %22 = arith.mulf %8, %21 : vector<2x128xf32>
    %23 = arith.addf %19, %22 : vector<2x128xf32>
    %c0_17 = arith.constant 0 : index
    %24 = memref.load %arg4[%c0_17] : memref<3xf32, #tpu.memory_space<smem>>
    %25 = vector.broadcast %24 : f32 to vector<2x128xf32>
    %26 = arith.addf %23, %25 : vector<2x128xf32>
    %cst = arith.constant 0.000000e+00 : f32
    %27 = vector.broadcast %cst : f32 to vector<2x128xf32>
    %28 = arith.cmpf ogt, %26, %27 : vector<2x128xf32>
    %29 = vector.broadcast %0 : f32 to vector<2x128xf32>
    %30 = arith.mulf %29, %26 : vector<2x128xf32>
    %31 = arith.select %28, %26, %30 : vector<2x128xi1>, vector<2x128xf32>
    %c4 = arith.constant 4 : index
    %32 = memref.load %arg3[%c4] : memref<12xf32, #tpu.memory_space<smem>>
    %33 = vector.broadcast %32 : f32 to vector<2x128xf32>
    %34 = arith.mulf %2, %33 : vector<2x128xf32>
    %c5 = arith.constant 5 : index
    %35 = memref.load %arg3[%c5] : memref<12xf32, #tpu.memory_space<smem>>
    %36 = vector.broadcast %35 : f32 to vector<2x128xf32>
    %37 = arith.mulf %4, %36 : vector<2x128xf32>
    %38 = arith.addf %34, %37 : vector<2x128xf32>
    %c6 = arith.constant 6 : index
    %39 = memref.load %arg3[%c6] : memref<12xf32, #tpu.memory_space<smem>>
    %40 = vector.broadcast %39 : f32 to vector<2x128xf32>
    %41 = arith.mulf %6, %40 : vector<2x128xf32>
    %42 = arith.addf %38, %41 : vector<2x128xf32>
    %c7 = arith.constant 7 : index
    %43 = memref.load %arg3[%c7] : memref<12xf32, #tpu.memory_space<smem>>
    %44 = vector.broadcast %43 : f32 to vector<2x128xf32>
    %45 = arith.mulf %8, %44 : vector<2x128xf32>
    %46 = arith.addf %42, %45 : vector<2x128xf32>
    %c1_18 = arith.constant 1 : index
    %47 = memref.load %arg4[%c1_18] : memref<3xf32, #tpu.memory_space<smem>>
    %48 = vector.broadcast %47 : f32 to vector<2x128xf32>
    %49 = arith.addf %46, %48 : vector<2x128xf32>
    %cst_19 = arith.constant 0.000000e+00 : f32
    %50 = vector.broadcast %cst_19 : f32 to vector<2x128xf32>
    %51 = arith.cmpf ogt, %49, %50 : vector<2x128xf32>
    %52 = vector.broadcast %0 : f32 to vector<2x128xf32>
    %53 = arith.mulf %52, %49 : vector<2x128xf32>
    %54 = arith.select %51, %49, %53 : vector<2x128xi1>, vector<2x128xf32>
    %55 = arith.minimumf %31, %54 : vector<2x128xf32>
    %56 = arith.maximumf %31, %54 : vector<2x128xf32>
    %c8 = arith.constant 8 : index
    %57 = memref.load %arg3[%c8] : memref<12xf32, #tpu.memory_space<smem>>
    %58 = vector.broadcast %57 : f32 to vector<2x128xf32>
    %59 = arith.mulf %2, %58 : vector<2x128xf32>
    %c9 = arith.constant 9 : index
    %60 = memref.load %arg3[%c9] : memref<12xf32, #tpu.memory_space<smem>>
    %61 = vector.broadcast %60 : f32 to vector<2x128xf32>
    %62 = arith.mulf %4, %61 : vector<2x128xf32>
    %63 = arith.addf %59, %62 : vector<2x128xf32>
    %c10 = arith.constant 10 : index
    %64 = memref.load %arg3[%c10] : memref<12xf32, #tpu.memory_space<smem>>
    %65 = vector.broadcast %64 : f32 to vector<2x128xf32>
    %66 = arith.mulf %6, %65 : vector<2x128xf32>
    %67 = arith.addf %63, %66 : vector<2x128xf32>
    %c11 = arith.constant 11 : index
    %68 = memref.load %arg3[%c11] : memref<12xf32, #tpu.memory_space<smem>>
    %69 = vector.broadcast %68 : f32 to vector<2x128xf32>
    %70 = arith.mulf %8, %69 : vector<2x128xf32>
    %71 = arith.addf %67, %70 : vector<2x128xf32>
    %c2_20 = arith.constant 2 : index
    %72 = memref.load %arg4[%c2_20] : memref<3xf32, #tpu.memory_space<smem>>
    %73 = vector.broadcast %72 : f32 to vector<2x128xf32>
    %74 = arith.addf %71, %73 : vector<2x128xf32>
    %cst_21 = arith.constant 0.000000e+00 : f32
    %75 = vector.broadcast %cst_21 : f32 to vector<2x128xf32>
    %76 = arith.cmpf ogt, %74, %75 : vector<2x128xf32>
    %77 = vector.broadcast %0 : f32 to vector<2x128xf32>
    %78 = arith.mulf %77, %74 : vector<2x128xf32>
    %79 = arith.select %76, %74, %78 : vector<2x128xi1>, vector<2x128xf32>
    %80 = arith.minimumf %55, %79 : vector<2x128xf32>
    %81 = arith.maximumf %56, %79 : vector<2x128xf32>
    %c0_22 = arith.constant 0 : index
    %c0_23 = arith.constant 0 : index
    %c0_24 = arith.constant 0 : index
    %c0_25 = arith.constant 0 : index
    %82 = vector.load %arg6[%c0_22, %c0_23, %c0_24, %c0_25] : memref<1x1x2x128xf32, #tpu.memory_space<vmem>>, vector<1x1x2x128xf32>
    %83 = vector.shape_cast %82 : vector<1x1x2x128xf32> to vector<2x128xf32>
    %84 = vector.shape_cast %80 : vector<2x128xf32> to vector<1x1x2x128xf32>
    tpu.vector_store %arg6[%c0_22, %c0_23, %c0_24, %c0_25], %84 {strides = array<i32>} : memref<1x1x2x128xf32, #tpu.memory_space<vmem>>, vector<1x1x2x128xf32>,
    %c0_26 = arith.constant 0 : index
    %c0_27 = arith.constant 0 : index
    %c0_28 = arith.constant 0 : index
    %c0_29 = arith.constant 0 : index
    %85 = vector.load %arg7[%c0_26, %c0_27, %c0_28, %c0_29] : memref<1x1x2x128xf32, #tpu.memory_space<vmem>>, vector<1x1x2x128xf32>
    %86 = vector.shape_cast %85 : vector<1x1x2x128xf32> to vector<2x128xf32>
    %87 = vector.shape_cast %81 : vector<2x128xf32> to vector<1x1x2x128xf32>
    tpu.vector_store %arg7[%c0_26, %c0_27, %c0_28, %c0_29], %87 {strides = array<i32>} : memref<1x1x2x128xf32, #tpu.memory_space<vmem>>, vector<1x1x2x128xf32>,
    return
  }
  func.func @transform_0(%arg0: i32, %arg1: i32) -> (i32, i32, i32, i32) {
    %c0_i32 = arith.constant 0 : i32
    %c0_i32_0 = arith.constant 0 : i32
    %c0_i32_1 = arith.constant 0 : i32
    return %arg0, %c0_i32, %arg1, %c0_i32_0 : i32, i32, i32, i32
  }
  func.func @transform_1(%arg0: i32, %arg1: i32) -> i32 {
    %c0_i32 = arith.constant 0 : i32
    %c0_i32_0 = arith.constant 0 : i32
    return %c0_i32 : i32
  }
  func.func @transform_2(%arg0: i32, %arg1: i32) -> i32 {
    %c0_i32 = arith.constant 0 : i32
    %c0_i32_0 = arith.constant 0 : i32
    return %c0_i32 : i32
  }
  func.func @transform_3(%arg0: i32, %arg1: i32) -> i32 {
    %c0_i32 = arith.constant 0 : i32
    %c0_i32_0 = arith.constant 0 : i32
    return %c0_i32 : i32
  }
  func.func @transform_4(%arg0: i32, %arg1: i32) -> (i32, i32, i32, i32) {
    %c0_i32 = arith.constant 0 : i32
    %c0_i32_0 = arith.constant 0 : i32
    %c0_i32_1 = arith.constant 0 : i32
    return %arg0, %arg1, %c0_i32, %c0_i32_0 : i32, i32, i32, i32
  }
  func.func @transform_5(%arg0: i32, %arg1: i32) -> (i32, i32, i32, i32) {
    %c0_i32 = arith.constant 0 : i32
    %c0_i32_0 = arith.constant 0 : i32
    %c0_i32_1 = arith.constant 0 : i32
    return %arg0, %arg1, %c0_i32, %c0_i32_0 : i32, i32, i32, i32
  }
}

module attributes {stable_mosaic.version = 11 : i64} {
  func.func @kernel(%arg0: i32, %arg1: i32, %arg2: memref<1x4x2x128xf32, #tpu.memory_space<vmem>>, %arg3: memref<12xf32, #tpu.memory_space<smem>>, %arg4: memref<3xf32, #tpu.memory_space<smem>>, %arg5: memref<3xf32, #tpu.memory_space<smem>>, %arg6: memref<1x3x2x128xf32, #tpu.memory_space<vmem>>) attributes {dimension_semantics = [#tpu.dimension_semantics<parallel>, #tpu.dimension_semantics<parallel>], iteration_bounds = array<i64: 2, 1>, scalar_prefetch = 0 : i64, scratch_operands = 0 : i64, tpu.core_type = #tpu.core_type<tc>, window_params = [{transform_indices = @transform_0, window_bounds = array<i64: 1, 4, 2, 128>}, {transform_indices = @transform_1, window_bounds = array<i64: 12>}, {transform_indices = @transform_2, window_bounds = array<i64: 3>}, {transform_indices = @transform_3, window_bounds = array<i64: 3>}, {transform_indices = @transform_4, window_bounds = array<i64: 1, 3, 2, 128>}]} {
    %c0 = arith.constant 0 : index
    %0 = memref.load %arg5[%c0] : memref<3xf32, #tpu.memory_space<smem>>
    %c1 = arith.constant 1 : index
    %1 = memref.load %arg5[%c1] : memref<3xf32, #tpu.memory_space<smem>>
    %c2 = arith.constant 2 : index
    %2 = memref.load %arg5[%c2] : memref<3xf32, #tpu.memory_space<smem>>
    %c0_0 = arith.constant 0 : index
    %c0_1 = arith.constant 0 : index
    %c0_2 = arith.constant 0 : index
    %c0_3 = arith.constant 0 : index
    %3 = vector.load %arg2[%c0_0, %c0_1, %c0_2, %c0_3] : memref<1x4x2x128xf32, #tpu.memory_space<vmem>>, vector<1x1x2x128xf32>
    %4 = vector.shape_cast %3 : vector<1x1x2x128xf32> to vector<2x128xf32>
    %c0_4 = arith.constant 0 : index
    %c1_5 = arith.constant 1 : index
    %c0_6 = arith.constant 0 : index
    %c0_7 = arith.constant 0 : index
    %5 = vector.load %arg2[%c0_4, %c1_5, %c0_6, %c0_7] : memref<1x4x2x128xf32, #tpu.memory_space<vmem>>, vector<1x1x2x128xf32>
    %6 = vector.shape_cast %5 : vector<1x1x2x128xf32> to vector<2x128xf32>
    %c0_8 = arith.constant 0 : index
    %c2_9 = arith.constant 2 : index
    %c0_10 = arith.constant 0 : index
    %c0_11 = arith.constant 0 : index
    %7 = vector.load %arg2[%c0_8, %c2_9, %c0_10, %c0_11] : memref<1x4x2x128xf32, #tpu.memory_space<vmem>>, vector<1x1x2x128xf32>
    %8 = vector.shape_cast %7 : vector<1x1x2x128xf32> to vector<2x128xf32>
    %c0_12 = arith.constant 0 : index
    %c3 = arith.constant 3 : index
    %c0_13 = arith.constant 0 : index
    %c0_14 = arith.constant 0 : index
    %9 = vector.load %arg2[%c0_12, %c3, %c0_13, %c0_14] : memref<1x4x2x128xf32, #tpu.memory_space<vmem>>, vector<1x1x2x128xf32>
    %10 = vector.shape_cast %9 : vector<1x1x2x128xf32> to vector<2x128xf32>
    %c0_15 = arith.constant 0 : index
    %11 = memref.load %arg3[%c0_15] : memref<12xf32, #tpu.memory_space<smem>>
    %12 = vector.broadcast %11 : f32 to vector<2x128xf32>
    %13 = arith.mulf %4, %12 : vector<2x128xf32>
    %c1_16 = arith.constant 1 : index
    %14 = memref.load %arg3[%c1_16] : memref<12xf32, #tpu.memory_space<smem>>
    %15 = vector.broadcast %14 : f32 to vector<2x128xf32>
    %16 = arith.mulf %6, %15 : vector<2x128xf32>
    %17 = arith.addf %13, %16 : vector<2x128xf32>
    %c2_17 = arith.constant 2 : index
    %18 = memref.load %arg3[%c2_17] : memref<12xf32, #tpu.memory_space<smem>>
    %19 = vector.broadcast %18 : f32 to vector<2x128xf32>
    %20 = arith.mulf %8, %19 : vector<2x128xf32>
    %21 = arith.addf %17, %20 : vector<2x128xf32>
    %c3_18 = arith.constant 3 : index
    %22 = memref.load %arg3[%c3_18] : memref<12xf32, #tpu.memory_space<smem>>
    %23 = vector.broadcast %22 : f32 to vector<2x128xf32>
    %24 = arith.mulf %10, %23 : vector<2x128xf32>
    %25 = arith.addf %21, %24 : vector<2x128xf32>
    %c0_19 = arith.constant 0 : index
    %26 = memref.load %arg4[%c0_19] : memref<3xf32, #tpu.memory_space<smem>>
    %27 = vector.broadcast %26 : f32 to vector<2x128xf32>
    %28 = arith.addf %25, %27 : vector<2x128xf32>
    %cst = arith.constant 0.000000e+00 : f32
    %29 = vector.broadcast %cst : f32 to vector<2x128xf32>
    %30 = arith.cmpf ogt, %28, %29 : vector<2x128xf32>
    %31 = vector.broadcast %0 : f32 to vector<2x128xf32>
    %32 = arith.mulf %31, %28 : vector<2x128xf32>
    %33 = arith.select %30, %28, %32 : vector<2x128xi1>, vector<2x128xf32>
    %34 = vector.broadcast %1 : f32 to vector<2x128xf32>
    %35 = arith.subf %33, %34 : vector<2x128xf32>
    %36 = vector.broadcast %2 : f32 to vector<2x128xf32>
    %37 = arith.mulf %35, %36 : vector<2x128xf32>
    %c0_20 = arith.constant 0 : index
    %c0_21 = arith.constant 0 : index
    %c0_22 = arith.constant 0 : index
    %c0_23 = arith.constant 0 : index
    %38 = vector.load %arg6[%c0_20, %c0_21, %c0_22, %c0_23] : memref<1x3x2x128xf32, #tpu.memory_space<vmem>>, vector<1x1x2x128xf32>
    %39 = vector.shape_cast %38 : vector<1x1x2x128xf32> to vector<2x128xf32>
    %40 = vector.shape_cast %37 : vector<2x128xf32> to vector<1x1x2x128xf32>
    tpu.vector_store %arg6[%c0_20, %c0_21, %c0_22, %c0_23], %40 {strides = array<i32>} : memref<1x3x2x128xf32, #tpu.memory_space<vmem>>, vector<1x1x2x128xf32>,
    %c4 = arith.constant 4 : index
    %41 = memref.load %arg3[%c4] : memref<12xf32, #tpu.memory_space<smem>>
    %42 = vector.broadcast %41 : f32 to vector<2x128xf32>
    %43 = arith.mulf %4, %42 : vector<2x128xf32>
    %c5 = arith.constant 5 : index
    %44 = memref.load %arg3[%c5] : memref<12xf32, #tpu.memory_space<smem>>
    %45 = vector.broadcast %44 : f32 to vector<2x128xf32>
    %46 = arith.mulf %6, %45 : vector<2x128xf32>
    %47 = arith.addf %43, %46 : vector<2x128xf32>
    %c6 = arith.constant 6 : index
    %48 = memref.load %arg3[%c6] : memref<12xf32, #tpu.memory_space<smem>>
    %49 = vector.broadcast %48 : f32 to vector<2x128xf32>
    %50 = arith.mulf %8, %49 : vector<2x128xf32>
    %51 = arith.addf %47, %50 : vector<2x128xf32>
    %c7 = arith.constant 7 : index
    %52 = memref.load %arg3[%c7] : memref<12xf32, #tpu.memory_space<smem>>
    %53 = vector.broadcast %52 : f32 to vector<2x128xf32>
    %54 = arith.mulf %10, %53 : vector<2x128xf32>
    %55 = arith.addf %51, %54 : vector<2x128xf32>
    %c1_24 = arith.constant 1 : index
    %56 = memref.load %arg4[%c1_24] : memref<3xf32, #tpu.memory_space<smem>>
    %57 = vector.broadcast %56 : f32 to vector<2x128xf32>
    %58 = arith.addf %55, %57 : vector<2x128xf32>
    %cst_25 = arith.constant 0.000000e+00 : f32
    %59 = vector.broadcast %cst_25 : f32 to vector<2x128xf32>
    %60 = arith.cmpf ogt, %58, %59 : vector<2x128xf32>
    %61 = vector.broadcast %0 : f32 to vector<2x128xf32>
    %62 = arith.mulf %61, %58 : vector<2x128xf32>
    %63 = arith.select %60, %58, %62 : vector<2x128xi1>, vector<2x128xf32>
    %64 = vector.broadcast %1 : f32 to vector<2x128xf32>
    %65 = arith.subf %63, %64 : vector<2x128xf32>
    %66 = vector.broadcast %2 : f32 to vector<2x128xf32>
    %67 = arith.mulf %65, %66 : vector<2x128xf32>
    %c0_26 = arith.constant 0 : index
    %c1_27 = arith.constant 1 : index
    %c0_28 = arith.constant 0 : index
    %c0_29 = arith.constant 0 : index
    %68 = vector.load %arg6[%c0_26, %c1_27, %c0_28, %c0_29] : memref<1x3x2x128xf32, #tpu.memory_space<vmem>>, vector<1x1x2x128xf32>
    %69 = vector.shape_cast %68 : vector<1x1x2x128xf32> to vector<2x128xf32>
    %70 = vector.shape_cast %67 : vector<2x128xf32> to vector<1x1x2x128xf32>
    tpu.vector_store %arg6[%c0_26, %c1_27, %c0_28, %c0_29], %70 {strides = array<i32>} : memref<1x3x2x128xf32, #tpu.memory_space<vmem>>, vector<1x1x2x128xf32>,
    %c8 = arith.constant 8 : index
    %71 = memref.load %arg3[%c8] : memref<12xf32, #tpu.memory_space<smem>>
    %72 = vector.broadcast %71 : f32 to vector<2x128xf32>
    %73 = arith.mulf %4, %72 : vector<2x128xf32>
    %c9 = arith.constant 9 : index
    %74 = memref.load %arg3[%c9] : memref<12xf32, #tpu.memory_space<smem>>
    %75 = vector.broadcast %74 : f32 to vector<2x128xf32>
    %76 = arith.mulf %6, %75 : vector<2x128xf32>
    %77 = arith.addf %73, %76 : vector<2x128xf32>
    %c10 = arith.constant 10 : index
    %78 = memref.load %arg3[%c10] : memref<12xf32, #tpu.memory_space<smem>>
    %79 = vector.broadcast %78 : f32 to vector<2x128xf32>
    %80 = arith.mulf %8, %79 : vector<2x128xf32>
    %81 = arith.addf %77, %80 : vector<2x128xf32>
    %c11 = arith.constant 11 : index
    %82 = memref.load %arg3[%c11] : memref<12xf32, #tpu.memory_space<smem>>
    %83 = vector.broadcast %82 : f32 to vector<2x128xf32>
    %84 = arith.mulf %10, %83 : vector<2x128xf32>
    %85 = arith.addf %81, %84 : vector<2x128xf32>
    %c2_30 = arith.constant 2 : index
    %86 = memref.load %arg4[%c2_30] : memref<3xf32, #tpu.memory_space<smem>>
    %87 = vector.broadcast %86 : f32 to vector<2x128xf32>
    %88 = arith.addf %85, %87 : vector<2x128xf32>
    %cst_31 = arith.constant 0.000000e+00 : f32
    %89 = vector.broadcast %cst_31 : f32 to vector<2x128xf32>
    %90 = arith.cmpf ogt, %88, %89 : vector<2x128xf32>
    %91 = vector.broadcast %0 : f32 to vector<2x128xf32>
    %92 = arith.mulf %91, %88 : vector<2x128xf32>
    %93 = arith.select %90, %88, %92 : vector<2x128xi1>, vector<2x128xf32>
    %94 = vector.broadcast %1 : f32 to vector<2x128xf32>
    %95 = arith.subf %93, %94 : vector<2x128xf32>
    %96 = vector.broadcast %2 : f32 to vector<2x128xf32>
    %97 = arith.mulf %95, %96 : vector<2x128xf32>
    %c0_32 = arith.constant 0 : index
    %c2_33 = arith.constant 2 : index
    %c0_34 = arith.constant 0 : index
    %c0_35 = arith.constant 0 : index
    %98 = vector.load %arg6[%c0_32, %c2_33, %c0_34, %c0_35] : memref<1x3x2x128xf32, #tpu.memory_space<vmem>>, vector<1x1x2x128xf32>
    %99 = vector.shape_cast %98 : vector<1x1x2x128xf32> to vector<2x128xf32>
    %100 = vector.shape_cast %97 : vector<2x128xf32> to vector<1x1x2x128xf32>
    tpu.vector_store %arg6[%c0_32, %c2_33, %c0_34, %c0_35], %100 {strides = array<i32>} : memref<1x3x2x128xf32, #tpu.memory_space<vmem>>, vector<1x1x2x128xf32>,
    return
  }
  func.func @transform_0(%arg0: i32, %arg1: i32) -> (i32, i32, i32, i32) {
    %c0_i32 = arith.constant 0 : i32
    %c0_i32_0 = arith.constant 0 : i32
    %c0_i32_1 = arith.constant 0 : i32
    return %arg0, %c0_i32, %arg1, %c0_i32_0 : i32, i32, i32, i32
  }
  func.func @transform_1(%arg0: i32, %arg1: i32) -> i32 {
    %c0_i32 = arith.constant 0 : i32
    %c0_i32_0 = arith.constant 0 : i32
    return %c0_i32 : i32
  }
  func.func @transform_2(%arg0: i32, %arg1: i32) -> i32 {
    %c0_i32 = arith.constant 0 : i32
    %c0_i32_0 = arith.constant 0 : i32
    return %c0_i32 : i32
  }
  func.func @transform_3(%arg0: i32, %arg1: i32) -> i32 {
    %c0_i32 = arith.constant 0 : i32
    %c0_i32_0 = arith.constant 0 : i32
    return %c0_i32 : i32
  }
  func.func @transform_4(%arg0: i32, %arg1: i32) -> (i32, i32, i32, i32) {
    %c0_i32 = arith.constant 0 : i32
    %c0_i32_0 = arith.constant 0 : i32
    %c0_i32_1 = arith.constant 0 : i32
    return %arg0, %c0_i32, %arg1, %c0_i32_0 : i32, i32, i32, i32
  }
}

</mosaic_0001>

<llo_original>
// kernel: mul.0
$region0: #{mul.0}
  #allocation0 [shape = 's32[1]{0}', space=sflag, size = 0x4, scoped, tag = 'scoped memory for mul.0']
  %s0 = inlined_call_operand.vmem [shape: f32[12], index: 0, kind: input, shape index: {}]
  %s1 = inlined_call_operand.vmem [shape: f32[12], index: 1, kind: input, shape index: {}]
  %s2 = inlined_call_operand.vmem [shape: f32[12], index: 2, kind: output, shape index: {}]
  %v3 = vld [vmem:[%s0] sm:$0x1]
  %v4 = vld [vmem:[%s1] sm:$0x1]
  %5 = xla_tuple %v3, %v4
  %6 = xla_tuple %5
  %v7 = vmul.f32 %v3, %v4
  %8 = xla_tuple %v7
  %9 = vst [vmem:[%s2] sm:$0x1] %v7

// kernel: out_conv_forward.2
$region0: #{out_conv_forward.2}
  #allocation0 [shape = 'u32[]', space=smem, size = 0x4, offset = 0x4, fixed_abs, tag = 'smem constant byte address 0x4 - core index']
  #allocation1 [shape = 'u32[144,128]{1,0:T(1,128)}', space=vmem, size = 0x12000, scoped, tag = 'internal scratch']
  #allocation2 [shape = 'f32[1]{0:T(128)S(6)}', space=smem, size = 0x200, scoped, tag = 'scoped memory for out_conv_forward.2']
  %s0 = inlined_call_operand.vmem [shape: f32[2,4,2,128], index: 0, kind: input, shape index: {}]
  %s1 = inlined_call_operand.vmem [shape: f32[12], index: 1, kind: input, shape index: {}]
  %s2 = inlined_call_operand.vmem [shape: f32[3], index: 2, kind: input, shape index: {}]
  %s3 = inlined_call_operand.<no memory space> [shape: f32[1], index: 3, kind: input, shape index: {}]
  %s4 = inlined_call_operand.vmem [shape: f32[2,1,2,128], index: 4, kind: output, shape index: {0}]
  %s5 = inlined_call_operand.vmem [shape: f32[2,1,2,128], index: 5, kind: output, shape index: {1}]
  %6 = xla_tuple %s4, %s5
  %s7 = sld [smem:[#allocation0]]
  $region65: #{out_conv_forward.2} parent=0
    _
  %s9 = ssub.s32 1, %s7
  %s10 = scalar_select 0, %s9, %s7
  %11 = sst [smem:[#allocation2]] %s3
  $region1: #{out_conv_forward.2} parent=0
    #allocation3 [shape = 'u8[512]{0}', space=smem, size = 0x200, scoped, tag = 'input window, operand 1, single buffered']
    #allocation4 [shape = 's32[2]{0}', space=sflag, size = 0x8, scoped, tag = 'scoped memory for out_conv_forward.2']
    #allocation5 [shape = 'u8[512]{0}', space=smem, size = 0x200, scoped, tag = 'input window, operand 2, single buffered']
    #allocation6 [shape = 's32[1]{0}', space=sflag, size = 0x4, scoped, tag = 'scoped memory for out_conv_forward.2']
    %12 = vsyncpa [#allocation4], 0
    %13 = vsyncpa [#allocation6], 0
    loop: start=0, step=1, limit=4
    $region2: #{out_conv_forward.2} parent=1 // loop_pre_header
      _
    $region3: #{out_conv_forward.2} parent=1 // loop_header
      %s15 = sphi 0, %s19
      %p16 = scmp.ge.s32.totalorder %s15, 4
      %s22 = sphi 0, %s34
      %s23 = sphi 0, %s30
      %s24 = sphi 0, %s22
      %s25 = sphi 0, %s23
      %s26 = sphi 0, %s24
      %s27 = sphi 0, %s25
      %s39 = sphi 0, %s41
      %s42 = sphi 0, %s39
      %s43 = sphi 0, %s42
      %s59 = sphi 0, %s43
      %s63 = sphi 0, %s63
      %s65 = sphi 0, %s63
      %s66 = sphi 0, %s65
      %s80 = sphi 0, %s66
      %s84 = sphi 0, %s84
      %s86 = sphi 0, %s84
      %s87 = sphi 0, %s86
      %s101 = sphi 0, %s87
      %s105 = sphi 0, %s105
      %s107 = sphi 0, %s105
      %s108 = sphi 0, %s107
      %s122 = sphi 0, %s108
      %s130 = sphi 0, %s132
      %s133 = sphi 0, %s130
      %s134 = sphi 0, %s133
      %s150 = sphi 0, %s134
      %s158 = sphi 0, %s160
      %s161 = sphi 0, %s158
      %s162 = sphi 0, %s161
      %s178 = sphi 0, %s162
    $region4: #{out_conv_forward.2} parent=1 // loop_header_branch
      %18 = sbr.rel (%p16) target = $region8
    $region5: #{out_conv_forward.2} parent=1 // loop_body
      %s20 = ssub.s32 %s15, 1
      %s21 = ssub.s32 %s15, 2
      %s28 = sadd.s32 1, %s23
      %p29 = scmp.ge.s32.totalorder %s28, 1
      %s30 = scalar_select %p29, 0, %s28
      %s31 = sadd.s32 1, %s22
      %s32 = scalar_select %p29, %s31, %s22
      %p33 = scmp.ge.s32.totalorder %s32, 2
      %s34 = scalar_select %p33, 0, %s32
      %s35 = ssub.s32 %s22, %s34
      %s36 = ssub.s32 %s23, %s30
      %s37 = sor.u32 %s35, %s36
      %p38 = scmp.eq.s32.totalorder %s37, 0
      %s40 = sadd.s32 %s39, 1
      %s41 = scalar_select %p38, %s39, %s40
      %p44 = pneg %p38
      %p45 = scmp.eq.s32.totalorder %s15, 1
      %p46 = por %p44, %p45
      %p47 = scmp.ne.s32.totalorder %s39, %s42
      %p48 = scmp.eq.s32.totalorder %s15, 0
      %p49 = por %p47, %p48
      %p50 = scmp.ne.s32.totalorder %s39, %s42
      %p51 = scmp.eq.s32.totalorder %s20, 1
      %p52 = por %p50, %p51
      %p53 = scmp.ne.s32.totalorder %s42, %s43
      %p54 = scmp.eq.s32.totalorder %s20, 0
      %p55 = por %p53, %p54
      %p56 = scmp.ne.s32.totalorder %s42, %s43
      %p57 = scmp.eq.s32.totalorder %s21, 1
      %p58 = por %p56, %p57
      %p60 = scmp.ne.s32.totalorder %s43, %s59
      %p61 = scmp.eq.s32.totalorder %s21, 0
      %p62 = por %p60, %p61
      %s64 = sadd.s32 %s63, 1
      %p67 = scmp.eq.s32.totalorder %s15, 1
      %p68 = scmp.ne.s32.totalorder %s63, %s65
      %p69 = scmp.eq.s32.totalorder %s15, 0
      %p70 = por %p68, %p69
      %p71 = scmp.ne.s32.totalorder %s63, %s65
      %p72 = scmp.eq.s32.totalorder %s20, 1
      %p73 = por %p71, %p72
      %p74 = scmp.ne.s32.totalorder %s65, %s66
      %p75 = scmp.eq.s32.totalorder %s20, 0
      %p76 = por %p74, %p75
      %p77 = scmp.ne.s32.totalorder %s65, %s66
      %p78 = scmp.eq.s32.totalorder %s21, 1
      %p79 = por %p77, %p78
      %p81 = scmp.ne.s32.totalorder %s66, %s80
      %p82 = scmp.eq.s32.totalorder %s21, 0
      %p83 = por %p81, %p82
      %s85 = sadd.s32 %s84, 1
      %p88 = scmp.eq.s32.totalorder %s15, 1
      %p89 = scmp.ne.s32.totalorder %s84, %s86
      %p90 = scmp.eq.s32.totalorder %s15, 0
      %p91 = por %p89, %p90
      %p92 = scmp.ne.s32.totalorder %s84, %s86
      %p93 = scmp.eq.s32.totalorder %s20, 1
      %p94 = por %p92, %p93
      %p95 = scmp.ne.s32.totalorder %s86, %s87
      %p96 = scmp.eq.s32.totalorder %s20, 0
      %p97 = por %p95, %p96
      %p98 = scmp.ne.s32.totalorder %s86, %s87
      %p99 = scmp.eq.s32.totalorder %s21, 1
      %p100 = por %p98, %p99
      %p102 = scmp.ne.s32.totalorder %s87, %s101
      %p103 = scmp.eq.s32.totalorder %s21, 0
      %p104 = por %p102, %p103
      %s106 = sadd.s32 %s105, 1
      %p109 = scmp.eq.s32.totalorder %s15, 1
      %p110 = scmp.ne.s32.totalorder %s105, %s107
      %p111 = scmp.eq.s32.totalorder %s15, 0
      %p112 = por %p110, %p111
      %p113 = scmp.ne.s32.totalorder %s105, %s107
      %p114 = scmp.eq.s32.totalorder %s20, 1
      %p115 = por %p113, %p114
      %p116 = scmp.ne.s32.totalorder %s107, %s108
      %p117 = scmp.eq.s32.totalorder %s20, 0
      %p118 = por %p116, %p117
      %p119 = scmp.ne.s32.totalorder %s107, %s108
      %p120 = scmp.eq.s32.totalorder %s21, 1
      %p121 = por %p119, %p120
      %p123 = scmp.ne.s32.totalorder %s108, %s122
      %p124 = scmp.eq.s32.totalorder %s21, 0
      %p125 = por %p123, %p124
      %s126 = ssub.s32 %s22, %s34
      %s127 = ssub.s32 %s23, %s30
      %s128 = sor.u32 %s126, %s127
      %p129 = scmp.eq.s32.totalorder %s128, 0
      %s131 = sadd.s32 %s130, 1
      %s132 = scalar_select %p129, %s130, %s131
      %p135 = pneg %p129
      %p136 = scmp.eq.s32.totalorder %s15, 1
      %p137 = por %p135, %p136
      %p138 = scmp.ne.s32.totalorder %s130, %s133
      %p139 = scmp.eq.s32.totalorder %s15, 0
      %p140 = por %p138, %p139
      %p141 = scmp.ne.s32.totalorder %s130, %s133
      %p142 = scmp.eq.s32.totalorder %s20, 1
      %p143 = por %p141, %p142
      %p144 = scmp.ne.s32.totalorder %s133, %s134
      %p145 = scmp.eq.s32.totalorder %s20, 0
      %p146 = por %p144, %p145
      %p147 = scmp.ne.s32.totalorder %s133, %s134
      %p148 = scmp.eq.s32.totalorder %s21, 1
      %p149 = por %p147, %p148
      %p151 = scmp.ne.s32.totalorder %s134, %s150
      %p152 = scmp.eq.s32.totalorder %s21, 0
      %p153 = por %p151, %p152
      %s154 = ssub.s32 %s22, %s34
      %s155 = ssub.s32 %s23, %s30
      %s156 = sor.u32 %s154, %s155
      %p157 = scmp.eq.s32.totalorder %s156, 0
      %s159 = sadd.s32 %s158, 1
      %s160 = scalar_select %p157, %s158, %s159
      %p163 = pneg %p157
      %p164 = scmp.eq.s32.totalorder %s15, 1
      %p165 = por %p163, %p164
      %p166 = scmp.ne.s32.totalorder %s158, %s161
      %p167 = scmp.eq.s32.totalorder %s15, 0
      %p168 = por %p166, %p167
      %p169 = scmp.ne.s32.totalorder %s158, %s161
      %p170 = scmp.eq.s32.totalorder %s20, 1
      %p171 = por %p169, %p170
      %p172 = scmp.ne.s32.totalorder %s161, %s162
      %p173 = scmp.eq.s32.totalorder %s20, 0
      %p174 = por %p172, %p173
      %p175 = scmp.ne.s32.totalorder %s161, %s162
      %p176 = scmp.eq.s32.totalorder %s21, 1
      %p177 = por %p175, %p176
      %p179 = scmp.ne.s32.totalorder %s162, %s178
      %p180 = scmp.eq.s32.totalorder %s21, 0
      %p181 = por %p179, %p180
      %p182 = scmp.le.s32.totalorder 1, %s15
      %p183 = scmp.lt.s32.totalorder %s15, 3
      %p184 = pnand %p182, %p183
      %p185 = pneg %p184
      // Predicated region
      $region9: #{out_conv_forward.2} parent=5 // pred_check
        _
      $region10: #{out_conv_forward.2} parent=5 // pred_check_branch
        %187 = sbr.rel (%p184) target = $region12
      $region11: #{out_conv_forward.2} parent=5 // pred_region
        %s188 = ssub.s32 %s15, 1
        // Predicated region
        $region13: #{out_conv_forward.2} parent=11 // pred_check
          %p189 = pneg %p76
        $region14: #{out_conv_forward.2} parent=11 // pred_check_branch
          %191 = sbr.rel (%p189) target = $region16
        $region15: #{out_conv_forward.2} parent=11 // pred_region
          %s193 = ssub.s32 16, 16
          %194 = vsyncadd [#allocation4], %s193
          %s196 = sshll.u32 %s1, 4
          %s197 = int_to_ptr.vmem [resolvable:$true] %s196
          %199 = dma.vmem_to_smem %s197, 16, [#allocation3], [#allocation4]
        $region16: #{out_conv_forward.2} parent=11 // pred_fallthru
          _
        // Predicated region
        $region17: #{out_conv_forward.2} parent=11 // pred_check
          %p200 = pneg %p97
        $region18: #{out_conv_forward.2} parent=11 // pred_check_branch
          %202 = sbr.rel (%p200) target = $region20
        $region19: #{out_conv_forward.2} parent=11 // pred_region
          %s204 = ssub.s32 16, 16
          %205 = vsyncadd [#allocation6], %s204
          %s207 = sshll.u32 %s2, 4
          %s208 = int_to_ptr.vmem [resolvable:$true] %s207
          %210 = dma.vmem_to_smem %s208, 16, [#allocation5], [#allocation6]
        $region20: #{out_conv_forward.2} parent=11 // pred_fallthru
          _
        // Predicated region
        $region21: #{out_conv_forward.2} parent=11 // pred_check
          %p211 = pneg %p118
        $region22: #{out_conv_forward.2} parent=11 // pred_check_branch
          %213 = sbr.rel (%p211) target = $region24
        $region23: #{out_conv_forward.2} parent=11 // pred_region
          _
        $region24: #{out_conv_forward.2} parent=11 // pred_fallthru
          _
      $region12: #{out_conv_forward.2} parent=5 // pred_fallthru
        _
      %p214 = scmp.lt.s32.totalorder %s15, 2
      // Predicated region
      $region25: #{out_conv_forward.2} parent=5 // pred_check
        %p215 = pneg %p214
      $region26: #{out_conv_forward.2} parent=5 // pred_check_branch
        %217 = sbr.rel (%p215) target = $region28
      $region27: #{out_conv_forward.2} parent=5 // pred_region
        // Predicated region
        $region29: #{out_conv_forward.2} parent=27 // pred_check
          %p218 = pneg %p49
        $region30: #{out_conv_forward.2} parent=27 // pred_check_branch
          %220 = sbr.rel (%p218) target = $region32
        $region31: #{out_conv_forward.2} parent=27 // pred_region
          %p221 = scmp.lt.s32.totalorder %s22, 1
          %s222 = scalar_select %p221, %s22, 1
          %p223 = scmp.lt.s32.totalorder %s23, 0
          %s224 = scalar_select %p223, %s23, 0
          %s225 = smul.addr %s222, 4
          %s226 = sadd.s32 %s224, %s225
          %s227 = smul.addr %s226, 2
          %s228 = scalar_lea.vmem %s0, %s227
        $region32: #{out_conv_forward.2} parent=27 // pred_fallthru
          _
      $region28: #{out_conv_forward.2} parent=5 // pred_fallthru
        _
      %p229 = scmp.le.s32.totalorder 1, %s15
      %p230 = scmp.lt.s32.totalorder %s15, 3
      %p231 = pnand %p229, %p230
      %p232 = pneg %p231
      // Predicated region
      $region33: #{out_conv_forward.2} parent=5 // pred_check
        _
      $region34: #{out_conv_forward.2} parent=5 // pred_check_branch
        %234 = sbr.rel (%p231) target = $region36
      $region35: #{out_conv_forward.2} parent=5 // pred_region
        %s235 = ssub.s32 %s15, 1
        // Predicated region
        $region37: #{out_conv_forward.2} parent=35 // pred_check
          %p236 = pneg %p76
        $region38: #{out_conv_forward.2} parent=35 // pred_check_branch
          %238 = sbr.rel (%p236) target = $region40
        $region39: #{out_conv_forward.2} parent=35 // pred_region
          %239 = dma.done [#allocation4], 16
        $region40: #{out_conv_forward.2} parent=35 // pred_fallthru
          _
        // Predicated region
        $region41: #{out_conv_forward.2} parent=35 // pred_check
          %p240 = pneg %p97
        $region42: #{out_conv_forward.2} parent=35 // pred_check_branch
          %242 = sbr.rel (%p240) target = $region44
        $region43: #{out_conv_forward.2} parent=35 // pred_region
          %243 = dma.done [#allocation6], 16
        $region44: #{out_conv_forward.2} parent=35 // pred_fallthru
          _
        %244 = sfence
        %p245 = scmp.lt.s32.totalorder %s24, 1
        %s246 = scalar_select %p245, %s24, 1
        %p247 = scmp.lt.s32.totalorder %s25, 0
        %s248 = scalar_select %p247, %s25, 0
        %s249 = smul.addr %s246, 4
        %s250 = sadd.s32 %s248, %s249
        %s251 = smul.addr %s250, 2
        %s252 = scalar_lea.vmem %s0, %s251
        %p253 = pneg %p55
        %p254 = pneg %p52
        %p255 = pneg %p76
        %p256 = pneg %p73
        %p257 = pneg %p97
        %p258 = pneg %p94
        %p259 = pneg %p118
        %p260 = pneg %p115
        %p261 = pneg %p146
        %p262 = pneg %p143
        %p263 = scmp.lt.s32.totalorder %s24, 1
        %s264 = scalar_select %p263, %s24, 1
        %p265 = scmp.lt.s32.totalorder %s25, 0
        %s266 = scalar_select %p265, %s25, 0
        %s267 = sadd.s32 %s266, %s264
        %s268 = smul.addr %s267, 2
        %s269 = scalar_lea.vmem %s4, %s268
        %p270 = pneg %p174
        %p271 = pneg %p171
        %p272 = scmp.lt.s32.totalorder %s24, 1
        %s273 = scalar_select %p272, %s24, 1
        %p274 = scmp.lt.s32.totalorder %s25, 0
        %s275 = scalar_select %p274, %s25, 0
        %s276 = sadd.s32 %s275, %s273
        %s277 = smul.addr %s276, 2
        %s278 = scalar_lea.vmem %s5, %s277
        %p279 = scmp.lt.s32.totalorder %s24, 1
        %s280 = scalar_select %p279, %s24, 1
        %p281 = scmp.lt.s32.totalorder %s25, 0
        %s282 = scalar_select %p281, %s25, 0
        %s283 = smul.addr %s280, 4
        %s284 = sadd.s32 %s282, %s283
        %s285 = smul.addr %s284, 2
        %s286 = scalar_lea.vmem %s0, %s285
        %p287 = scmp.lt.s32.totalorder %s24, 1
        %s288 = scalar_select %p287, %s24, 1
        %p289 = scmp.lt.s32.totalorder %s25, 0
        %s290 = scalar_select %p289, %s25, 0
        %s291 = sadd.s32 %s290, %s288
        %s292 = smul.addr %s291, 2
        %s293 = scalar_lea.vmem %s4, %s292
        %p294 = scmp.lt.s32.totalorder %s24, 1
        %s295 = scalar_select %p294, %s24, 1
        %p296 = scmp.lt.s32.totalorder %s25, 0
        %s297 = scalar_select %p296, %s25, 0
        %s298 = sadd.s32 %s297, %s295
        %s299 = smul.addr %s298, 2
        %s300 = scalar_lea.vmem %s5, %s299
        %s301 = sld [smem:[#allocation2]]
        %v302 = vld [vmem:[%s286] sm:$0x3]
        %s303 = scalar_lea.vmem %s286, 2
        %v304 = vld [vmem:[%s303] sm:$0x3]
        %s305 = scalar_lea.vmem %s286, 4
        %v306 = vld [vmem:[%s305] sm:$0x3]
        %s307 = scalar_lea.vmem %s286, 6
        %v308 = vld [vmem:[%s307] sm:$0x3]
        %s309 = sld [smem:[#allocation3]]
        %v310 = vstv %s309
        %v311 = vmul.f32 %v302, %v310
        %s312 = sld [smem:[#allocation3 + $0x1]]
        %v313 = vstv %s312
        %v314 = vmul.f32 %v304, %v313
        %v315 = vadd.f32 %v311, %v314
        %s316 = sld [smem:[#allocation3 + $0x2]]
        %v317 = vstv %s316
        %v318 = vmul.f32 %v306, %v317
        %v319 = vadd.f32 %v315, %v318
        %s320 = sld [smem:[#allocation3 + $0x3]]
        %v321 = vstv %s320
        %v322 = vmul.f32 %v308, %v321
        %v323 = vadd.f32 %v319, %v322
        %s324 = sld [smem:[#allocation5]]
        %v325 = vstv %s324
        %v326 = vadd.f32 %v323, %v325
        %vm327 = vcmp.gt.f32.partialorder %v326, 0.0
        %v328 = vstv %s301
        %v329 = vmul.f32 %v328, %v326
        %v330 = vsel %vm327, %v326, %v329
        %s331 = sld [smem:[#allocation3 + $0x4]]
        %v332 = vstv %s331
        %v333 = vmul.f32 %v302, %v332
        %s334 = sld [smem:[#allocation3 + $0x5]]
        %v335 = vstv %s334
        %v336 = vmul.f32 %v304, %v335
        %v337 = vadd.f32 %v333, %v336
        %s338 = sld [smem:[#allocation3 + $0x6]]
        %v339 = vstv %s338
        %v340 = vmul.f32 %v306, %v339
        %v341 = vadd.f32 %v337, %v340
        %s342 = sld [smem:[#allocation3 + $0x7]]
        %v343 = vstv %s342
        %v344 = vmul.f32 %v308, %v343
        %v345 = vadd.f32 %v341, %v344
        %s346 = sld [smem:[#allocation5 + $0x1]]
        %v347 = vstv %s346
        %v348 = vadd.f32 %v345, %v347
        %vm349 = vcmp.gt.f32.partialorder %v348, 0.0
        %v350 = vmul.f32 %v328, %v348
        %v351 = vsel %vm349, %v348, %v350
        %v352 = vmin.f32 %v330, %v351
        %v353 = vmax.f32 %v330, %v351
        %s354 = sld [smem:[#allocation3 + $0x8]]
        %v355 = vstv %s354
        %v356 = vmul.f32 %v302, %v355
        %s357 = sld [smem:[#allocation3 + $0x9]]
        %v358 = vstv %s357
        %v359 = vmul.f32 %v304, %v358
        %v360 = vadd.f32 %v356, %v359
        %s361 = sld [smem:[#allocation3 + $0xa]]
        %v362 = vstv %s361
        %v363 = vmul.f32 %v306, %v362
        %v364 = vadd.f32 %v360, %v363
        %s365 = sld [smem:[#allocation3 + $0xb]]
        %v366 = vstv %s365
        %v367 = vmul.f32 %v308, %v366
        %v368 = vadd.f32 %v364, %v367
        %s369 = sld [smem:[#allocation5 + $0x2]]
        %v370 = vstv %s369
        %v371 = vadd.f32 %v368, %v370
        %vm372 = vcmp.gt.f32.partialorder %v371, 0.0
        %v373 = vmul.f32 %v328, %v371
        %v374 = vsel %vm372, %v371, %v373
        %v375 = vmin.f32 %v352, %v374
        %v376 = vmax.f32 %v353, %v374
        %377 = vst [vmem:[%s293] sm:$0x3] %v375
        %378 = vst [vmem:[%s300] sm:$0x3] %v376
        %p379 = scmp.lt.s32.totalorder %s24, 1
        %s380 = scalar_select %p379, %s24, 1
        %p381 = scmp.lt.s32.totalorder %s25, 0
        %s382 = scalar_select %p381, %s25, 0
        %s383 = sadd.s32 %s382, %s380
        %s384 = smul.addr %s383, 2
        %s385 = scalar_lea.vmem %s4, %s384
        %p386 = scmp.lt.s32.totalorder %s24, 1
        %s387 = scalar_select %p386, %s24, 1
        %p388 = scmp.lt.s32.totalorder %s25, 0
        %s389 = scalar_select %p388, %s25, 0
        %s390 = sadd.s32 %s389, %s387
        %s391 = smul.addr %s390, 2
        %s392 = scalar_lea.vmem %s5, %s391
        // Predicated region
        $region45: #{out_conv_forward.2} parent=35 // pred_check
          %p393 = pneg %p143
        $region46: #{out_conv_forward.2} parent=35 // pred_check_branch
          %395 = sbr.rel (%p393) target = $region48
        $region47: #{out_conv_forward.2} parent=35 // pred_region
          _
        $region48: #{out_conv_forward.2} parent=35 // pred_fallthru
          _
        // Predicated region
        $region49: #{out_conv_forward.2} parent=35 // pred_check
          %p396 = pneg %p171
        $region50: #{out_conv_forward.2} parent=35 // pred_check_branch
          %398 = sbr.rel (%p396) target = $region52
        $region51: #{out_conv_forward.2} parent=35 // pred_region
          _
        $region52: #{out_conv_forward.2} parent=35 // pred_fallthru
          _
      $region36: #{out_conv_forward.2} parent=5 // pred_fallthru
        _
      %p399 = scmp.le.s32.totalorder 2, %s15
      // Predicated region
      $region53: #{out_conv_forward.2} parent=5 // pred_check
        %p400 = pneg %p399
      $region54: #{out_conv_forward.2} parent=5 // pred_check_branch
        %402 = sbr.rel (%p400) target = $region56
      $region55: #{out_conv_forward.2} parent=5 // pred_region
        %s403 = ssub.s32 %s15, 2
        // Predicated region
        $region57: #{out_conv_forward.2} parent=55 // pred_check
          %p404 = pneg %p149
        $region58: #{out_conv_forward.2} parent=55 // pred_check_branch
          %406 = sbr.rel (%p404) target = $region60
        $region59: #{out_conv_forward.2} parent=55 // pred_region
          %p407 = scmp.lt.s32.totalorder %s26, 1
          %s408 = scalar_select %p407, %s26, 1
          %p409 = scmp.lt.s32.totalorder %s27, 0
          %s410 = scalar_select %p409, %s27, 0
          %s411 = sadd.s32 %s410, %s408
          %s412 = smul.addr %s411, 2
          %s413 = scalar_lea.vmem %s4, %s412
        $region60: #{out_conv_forward.2} parent=55 // pred_fallthru
          _
        // Predicated region
        $region61: #{out_conv_forward.2} parent=55 // pred_check
          %p414 = pneg %p177
        $region62: #{out_conv_forward.2} parent=55 // pred_check_branch
          %416 = sbr.rel (%p414) target = $region64
        $region63: #{out_conv_forward.2} parent=55 // pred_region
          %p417 = scmp.lt.s32.totalorder %s26, 1
          %s418 = scalar_select %p417, %s26, 1
          %p419 = scmp.lt.s32.totalorder %s27, 0
          %s420 = scalar_select %p419, %s27, 0
          %s421 = sadd.s32 %s420, %s418
          %s422 = smul.addr %s421, 2
          %s423 = scalar_lea.vmem %s5, %s422
        $region64: #{out_conv_forward.2} parent=55 // pred_fallthru
          _
      $region56: #{out_conv_forward.2} parent=5 // pred_fallthru
        _
    $region6: #{out_conv_forward.2} parent=1 // loop_footer
      %s19 = sadd.s32 1, %s15
    $region7: #{out_conv_forward.2} parent=1 // loop_footer_branch
      %14 = sbr.rel target = $region3
    $region8: #{out_conv_forward.2} parent=1 // loop_exit
      _
    %424 = vsyncpa [#allocation4], 1
    %s425 = scalar_lea.sflag [#allocation4], 1
    %426 = vsyncpa %s425, 1
    %427 = vsyncpa [#allocation6], 1

// kernel: out_conv_forward.3
$region0: #{out_conv_forward.3}
  #allocation0 [shape = 'u32[]', space=smem, size = 0x4, offset = 0x4, fixed_abs, tag = 'smem constant byte address 0x4 - core index']
  #allocation1 [shape = 'u32[144,128]{1,0:T(1,128)}', space=vmem, size = 0x12000, scoped, tag = 'internal scratch']
  %s0 = inlined_call_operand.vmem [shape: f32[2,4,2,128], index: 0, kind: input, shape index: {}]
  %s1 = inlined_call_operand.vmem [shape: f32[12], index: 1, kind: input, shape index: {}]
  %s2 = inlined_call_operand.vmem [shape: f32[3], index: 2, kind: input, shape index: {}]
  %s3 = inlined_call_operand.vmem [shape: f32[3], index: 3, kind: input, shape index: {}]
  %s4 = inlined_call_operand.vmem [shape: f32[2,3,2,128], index: 4, kind: output, shape index: {}]
  %s5 = sld [smem:[#allocation0]]
  $region61: #{out_conv_forward.3} parent=0
    _
  %s7 = ssub.s32 1, %s5
  %s8 = scalar_select 0, %s7, %s5
  $region1: #{out_conv_forward.3} parent=0
    #allocation2 [shape = 'u8[512]{0}', space=smem, size = 0x200, scoped, tag = 'input window, operand 1, single buffered']
    #allocation3 [shape = 's32[2]{0}', space=sflag, size = 0x8, scoped, tag = 'scoped memory for out_conv_forward.3']
    #allocation4 [shape = 'u8[512]{0}', space=smem, size = 0x200, scoped, tag = 'input window, operand 2, single buffered']
    #allocation5 [shape = 's32[1]{0}', space=sflag, size = 0x4, scoped, tag = 'scoped memory for out_conv_forward.3']
    #allocation6 [shape = 'u8[512]{0}', space=smem, size = 0x200, scoped, tag = 'input window, operand 3, single buffered']
    %9 = vsyncpa [#allocation3], 0
    %10 = vsyncpa [#allocation5], 0
    loop: start=0, step=1, limit=4
    $region2: #{out_conv_forward.3} parent=1 // loop_pre_header
      _
    $region3: #{out_conv_forward.3} parent=1 // loop_header
      %s12 = sphi 0, %s16
      %p13 = scmp.ge.s32.totalorder %s12, 4
      %s19 = sphi 0, %s31
      %s20 = sphi 0, %s27
      %s21 = sphi 0, %s19
      %s22 = sphi 0, %s20
      %s23 = sphi 0, %s21
      %s24 = sphi 0, %s22
      %s36 = sphi 0, %s38
      %s39 = sphi 0, %s36
      %s40 = sphi 0, %s39
      %s56 = sphi 0, %s40
      %s60 = sphi 0, %s60
      %s62 = sphi 0, %s60
      %s63 = sphi 0, %s62
      %s77 = sphi 0, %s63
      %s81 = sphi 0, %s81
      %s83 = sphi 0, %s81
      %s84 = sphi 0, %s83
      %s98 = sphi 0, %s84
      %s102 = sphi 0, %s102
      %s104 = sphi 0, %s102
      %s105 = sphi 0, %s104
      %s119 = sphi 0, %s105
      %s127 = sphi 0, %s129
      %s130 = sphi 0, %s127
      %s131 = sphi 0, %s130
      %s147 = sphi 0, %s131
    $region4: #{out_conv_forward.3} parent=1 // loop_header_branch
      %15 = sbr.rel (%p13) target = $region8
    $region5: #{out_conv_forward.3} parent=1 // loop_body
      %s17 = ssub.s32 %s12, 1
      %s18 = ssub.s32 %s12, 2
      %s25 = sadd.s32 1, %s20
      %p26 = scmp.ge.s32.totalorder %s25, 1
      %s27 = scalar_select %p26, 0, %s25
      %s28 = sadd.s32 1, %s19
      %s29 = scalar_select %p26, %s28, %s19
      %p30 = scmp.ge.s32.totalorder %s29, 2
      %s31 = scalar_select %p30, 0, %s29
      %s32 = ssub.s32 %s19, %s31
      %s33 = ssub.s32 %s20, %s27
      %s34 = sor.u32 %s32, %s33
      %p35 = scmp.eq.s32.totalorder %s34, 0
      %s37 = sadd.s32 %s36, 1
      %s38 = scalar_select %p35, %s36, %s37
      %p41 = pneg %p35
      %p42 = scmp.eq.s32.totalorder %s12, 1
      %p43 = por %p41, %p42
      %p44 = scmp.ne.s32.totalorder %s36, %s39
      %p45 = scmp.eq.s32.totalorder %s12, 0
      %p46 = por %p44, %p45
      %p47 = scmp.ne.s32.totalorder %s36, %s39
      %p48 = scmp.eq.s32.totalorder %s17, 1
      %p49 = por %p47, %p48
      %p50 = scmp.ne.s32.totalorder %s39, %s40
      %p51 = scmp.eq.s32.totalorder %s17, 0
      %p52 = por %p50, %p51
      %p53 = scmp.ne.s32.totalorder %s39, %s40
      %p54 = scmp.eq.s32.totalorder %s18, 1
      %p55 = por %p53, %p54
      %p57 = scmp.ne.s32.totalorder %s40, %s56
      %p58 = scmp.eq.s32.totalorder %s18, 0
      %p59 = por %p57, %p58
      %s61 = sadd.s32 %s60, 1
      %p64 = scmp.eq.s32.totalorder %s12, 1
      %p65 = scmp.ne.s32.totalorder %s60, %s62
      %p66 = scmp.eq.s32.totalorder %s12, 0
      %p67 = por %p65, %p66
      %p68 = scmp.ne.s32.totalorder %s60, %s62
      %p69 = scmp.eq.s32.totalorder %s17, 1
      %p70 = por %p68, %p69
      %p71 = scmp.ne.s32.totalorder %s62, %s63
      %p72 = scmp.eq.s32.totalorder %s17, 0
      %p73 = por %p71, %p72
      %p74 = scmp.ne.s32.totalorder %s62, %s63
      %p75 = scmp.eq.s32.totalorder %s18, 1
      %p76 = por %p74, %p75
      %p78 = scmp.ne.s32.totalorder %s63, %s77
      %p79 = scmp.eq.s32.totalorder %s18, 0
      %p80 = por %p78, %p79
      %s82 = sadd.s32 %s81, 1
      %p85 = scmp.eq.s32.totalorder %s12, 1
      %p86 = scmp.ne.s32.totalorder %s81, %s83
      %p87 = scmp.eq.s32.totalorder %s12, 0
      %p88 = por %p86, %p87
      %p89 = scmp.ne.s32.totalorder %s81, %s83
      %p90 = scmp.eq.s32.totalorder %s17, 1
      %p91 = por %p89, %p90
      %p92 = scmp.ne.s32.totalorder %s83, %s84
      %p93 = scmp.eq.s32.totalorder %s17, 0
      %p94 = por %p92, %p93
      %p95 = scmp.ne.s32.totalorder %s83, %s84
      %p96 = scmp.eq.s32.totalorder %s18, 1
      %p97 = por %p95, %p96
      %p99 = scmp.ne.s32.totalorder %s84, %s98
      %p100 = scmp.eq.s32.totalorder %s18, 0
      %p101 = por %p99, %p100
      %s103 = sadd.s32 %s102, 1
      %p106 = scmp.eq.s32.totalorder %s12, 1
      %p107 = scmp.ne.s32.totalorder %s102, %s104
      %p108 = scmp.eq.s32.totalorder %s12, 0
      %p109 = por %p107, %p108
      %p110 = scmp.ne.s32.totalorder %s102, %s104
      %p111 = scmp.eq.s32.totalorder %s17, 1
      %p112 = por %p110, %p111
      %p113 = scmp.ne.s32.totalorder %s104, %s105
      %p114 = scmp.eq.s32.totalorder %s17, 0
      %p115 = por %p113, %p114
      %p116 = scmp.ne.s32.totalorder %s104, %s105
      %p117 = scmp.eq.s32.totalorder %s18, 1
      %p118 = por %p116, %p117
      %p120 = scmp.ne.s32.totalorder %s105, %s119
      %p121 = scmp.eq.s32.totalorder %s18, 0
      %p122 = por %p120, %p121
      %s123 = ssub.s32 %s19, %s31
      %s124 = ssub.s32 %s20, %s27
      %s125 = sor.u32 %s123, %s124
      %p126 = scmp.eq.s32.totalorder %s125, 0
      %s128 = sadd.s32 %s127, 1
      %s129 = scalar_select %p126, %s127, %s128
      %p132 = pneg %p126
      %p133 = scmp.eq.s32.totalorder %s12, 1
      %p134 = por %p132, %p133
      %p135 = scmp.ne.s32.totalorder %s127, %s130
      %p136 = scmp.eq.s32.totalorder %s12, 0
      %p137 = por %p135, %p136
      %p138 = scmp.ne.s32.totalorder %s127, %s130
      %p139 = scmp.eq.s32.totalorder %s17, 1
      %p140 = por %p138, %p139
      %p141 = scmp.ne.s32.totalorder %s130, %s131
      %p142 = scmp.eq.s32.totalorder %s17, 0
      %p143 = por %p141, %p142
      %p144 = scmp.ne.s32.totalorder %s130, %s131
      %p145 = scmp.eq.s32.totalorder %s18, 1
      %p146 = por %p144, %p145
      %p148 = scmp.ne.s32.totalorder %s131, %s147
      %p149 = scmp.eq.s32.totalorder %s18, 0
      %p150 = por %p148, %p149
      %p151 = scmp.le.s32.totalorder 1, %s12
      %p152 = scmp.lt.s32.totalorder %s12, 3
      %p153 = pnand %p151, %p152
      %p154 = pneg %p153
      // Predicated region
      $region9: #{out_conv_forward.3} parent=5 // pred_check
        _
      $region10: #{out_conv_forward.3} parent=5 // pred_check_branch
        %156 = sbr.rel (%p153) target = $region12
      $region11: #{out_conv_forward.3} parent=5 // pred_region
        %s157 = ssub.s32 %s12, 1
        // Predicated region
        $region13: #{out_conv_forward.3} parent=11 // pred_check
          %p158 = pneg %p73
        $region14: #{out_conv_forward.3} parent=11 // pred_check_branch
          %160 = sbr.rel (%p158) target = $region16
        $region15: #{out_conv_forward.3} parent=11 // pred_region
          %s162 = ssub.s32 16, 16
          %163 = vsyncadd [#allocation3], %s162
          %s165 = sshll.u32 %s1, 4
          %s166 = int_to_ptr.vmem [resolvable:$true] %s165
          %168 = dma.vmem_to_smem %s166, 16, [#allocation2], [#allocation3]
        $region16: #{out_conv_forward.3} parent=11 // pred_fallthru
          _
        // Predicated region
        $region17: #{out_conv_forward.3} parent=11 // pred_check
          %p169 = pneg %p94
        $region18: #{out_conv_forward.3} parent=11 // pred_check_branch
          %171 = sbr.rel (%p169) target = $region20
        $region19: #{out_conv_forward.3} parent=11 // pred_region
          %s173 = ssub.s32 16, 16
          %174 = vsyncadd [#allocation5], %s173
          %s176 = sshll.u32 %s2, 4
          %s177 = int_to_ptr.vmem [resolvable:$true] %s176
          %179 = dma.vmem_to_smem %s177, 16, [#allocation4], [#allocation5]
        $region20: #{out_conv_forward.3} parent=11 // pred_fallthru
          _
        // Predicated region
        $region21: #{out_conv_forward.3} parent=11 // pred_check
          %p180 = pneg %p115
        $region22: #{out_conv_forward.3} parent=11 // pred_check_branch
          %182 = sbr.rel (%p180) target = $region24
        $region23: #{out_conv_forward.3} parent=11 // pred_region
          %s184 = ssub.s32 16, 16
          %185 = vsyncadd [#allocation5], %s184
          %s187 = sshll.u32 %s3, 4
          %s188 = int_to_ptr.vmem [resolvable:$true] %s187
          %190 = dma.vmem_to_smem %s188, 16, [#allocation6], [#allocation5]
        $region24: #{out_conv_forward.3} parent=11 // pred_fallthru
          _
      $region12: #{out_conv_forward.3} parent=5 // pred_fallthru
        _
      %p191 = scmp.lt.s32.totalorder %s12, 2
      // Predicated region
      $region25: #{out_conv_forward.3} parent=5 // pred_check
        %p192 = pneg %p191
      $region26: #{out_conv_forward.3} parent=5 // pred_check_branch
        %194 = sbr.rel (%p192) target = $region28
      $region27: #{out_conv_forward.3} parent=5 // pred_region
        // Predicated region
        $region29: #{out_conv_forward.3} parent=27 // pred_check
          %p195 = pneg %p46
        $region30: #{out_conv_forward.3} parent=27 // pred_check_branch
          %197 = sbr.rel (%p195) target = $region32
        $region31: #{out_conv_forward.3} parent=27 // pred_region
          %p198 = scmp.lt.s32.totalorder %s19, 1
          %s199 = scalar_select %p198, %s19, 1
          %p200 = scmp.lt.s32.totalorder %s20, 0
          %s201 = scalar_select %p200, %s20, 0
          %s202 = smul.addr %s199, 4
          %s203 = sadd.s32 %s201, %s202
          %s204 = smul.addr %s203, 2
          %s205 = scalar_lea.vmem %s0, %s204
        $region32: #{out_conv_forward.3} parent=27 // pred_fallthru
          _
      $region28: #{out_conv_forward.3} parent=5 // pred_fallthru
        _
      %p206 = scmp.le.s32.totalorder 1, %s12
      %p207 = scmp.lt.s32.totalorder %s12, 3
      %p208 = pnand %p206, %p207
      %p209 = pneg %p208
      // Predicated region
      $region33: #{out_conv_forward.3} parent=5 // pred_check
        _
      $region34: #{out_conv_forward.3} parent=5 // pred_check_branch
        %211 = sbr.rel (%p208) target = $region36
      $region35: #{out_conv_forward.3} parent=5 // pred_region
        %s212 = ssub.s32 %s12, 1
        // Predicated region
        $region37: #{out_conv_forward.3} parent=35 // pred_check
          %p213 = pneg %p73
        $region38: #{out_conv_forward.3} parent=35 // pred_check_branch
          %215 = sbr.rel (%p213) target = $region40
        $region39: #{out_conv_forward.3} parent=35 // pred_region
          %216 = dma.done [#allocation3], 16
        $region40: #{out_conv_forward.3} parent=35 // pred_fallthru
          _
        // Predicated region
        $region41: #{out_conv_forward.3} parent=35 // pred_check
          %p217 = pneg %p94
        $region42: #{out_conv_forward.3} parent=35 // pred_check_branch
          %219 = sbr.rel (%p217) target = $region44
        $region43: #{out_conv_forward.3} parent=35 // pred_region
          %220 = dma.done [#allocation5], 16
        $region44: #{out_conv_forward.3} parent=35 // pred_fallthru
          _
        // Predicated region
        $region45: #{out_conv_forward.3} parent=35 // pred_check
          %p221 = pneg %p115
        $region46: #{out_conv_forward.3} parent=35 // pred_check_branch
          %223 = sbr.rel (%p221) target = $region48
        $region47: #{out_conv_forward.3} parent=35 // pred_region
          %224 = dma.done [#allocation5], 16
        $region48: #{out_conv_forward.3} parent=35 // pred_fallthru
          _
        %225 = sfence
        %p226 = scmp.lt.s32.totalorder %s21, 1
        %s227 = scalar_select %p226, %s21, 1
        %p228 = scmp.lt.s32.totalorder %s22, 0
        %s229 = scalar_select %p228, %s22, 0
        %s230 = smul.addr %s227, 4
        %s231 = sadd.s32 %s229, %s230
        %s232 = smul.addr %s231, 2
        %s233 = scalar_lea.vmem %s0, %s232
        %p234 = pneg %p52
        %p235 = pneg %p49
        %p236 = pneg %p73
        %p237 = pneg %p70
        %p238 = pneg %p94
        %p239 = pneg %p91
        %p240 = pneg %p115
        %p241 = pneg %p112
        %p242 = pneg %p143
        %p243 = pneg %p140
        %p244 = scmp.lt.s32.totalorder %s21, 1
        %s245 = scalar_select %p244, %s21, 1
        %p246 = scmp.lt.s32.totalorder %s22, 0
        %s247 = scalar_select %p246, %s22, 0
        %s248 = smul.addr %s245, 3
        %s249 = sadd.s32 %s247, %s248
        %s250 = smul.addr %s249, 2
        %s251 = scalar_lea.vmem %s4, %s250
        %p252 = scmp.lt.s32.totalorder %s21, 1
        %s253 = scalar_select %p252, %s21, 1
        %p254 = scmp.lt.s32.totalorder %s22, 0
        %s255 = scalar_select %p254, %s22, 0
        %s256 = smul.addr %s253, 4
        %s257 = sadd.s32 %s255, %s256
        %s258 = smul.addr %s257, 2
        %s259 = scalar_lea.vmem %s0, %s258
        %p260 = scmp.lt.s32.totalorder %s21, 1
        %s261 = scalar_select %p260, %s21, 1
        %p262 = scmp.lt.s32.totalorder %s22, 0
        %s263 = scalar_select %p262, %s22, 0
        %s264 = smul.addr %s261, 3
        %s265 = sadd.s32 %s263, %s264
        %s266 = smul.addr %s265, 2
        %s267 = scalar_lea.vmem %s4, %s266
        %s268 = sld [smem:[#allocation6]]
        %s269 = sld [smem:[#allocation6 + $0x1]]
        %s270 = sld [smem:[#allocation6 + $0x2]]
        %v271 = vld [vmem:[%s259] sm:$0x3]
        %s272 = scalar_lea.vmem %s259, 2
        %v273 = vld [vmem:[%s272] sm:$0x3]
        %s274 = scalar_lea.vmem %s259, 4
        %v275 = vld [vmem:[%s274] sm:$0x3]
        %s276 = scalar_lea.vmem %s259, 6
        %v277 = vld [vmem:[%s276] sm:$0x3]
        %s278 = sld [smem:[#allocation2]]
        %v279 = vstv %s278
        %v280 = vmul.f32 %v271, %v279
        %s281 = sld [smem:[#allocation2 + $0x1]]
        %v282 = vstv %s281
        %v283 = vmul.f32 %v273, %v282
        %v284 = vadd.f32 %v280, %v283
        %s285 = sld [smem:[#allocation2 + $0x2]]
        %v286 = vstv %s285
        %v287 = vmul.f32 %v275, %v286
        %v288 = vadd.f32 %v284, %v287
        %s289 = sld [smem:[#allocation2 + $0x3]]
        %v290 = vstv %s289
        %v291 = vmul.f32 %v277, %v290
        %v292 = vadd.f32 %v288, %v291
        %s293 = sld [smem:[#allocation4]]
        %v294 = vstv %s293
        %v295 = vadd.f32 %v292, %v294
        %vm296 = vcmp.gt.f32.partialorder %v295, 0.0
        %v297 = vstv %s268
        %v298 = vmul.f32 %v297, %v295
        %v299 = vsel %vm296, %v295, %v298
        %v300 = vstv %s269
        %v301 = vsub.f32 %v299, %v300
        %v302 = vstv %s270
        %v303 = vmul.f32 %v301, %v302
        %304 = vst [vmem:[%s267] sm:$0x3] %v303
        %s305 = sld [smem:[#allocation2 + $0x4]]
        %v306 = vstv %s305
        %v307 = vmul.f32 %v271, %v306
        %s308 = sld [smem:[#allocation2 + $0x5]]
        %v309 = vstv %s308
        %v310 = vmul.f32 %v273, %v309
        %v311 = vadd.f32 %v307, %v310
        %s312 = sld [smem:[#allocation2 + $0x6]]
        %v313 = vstv %s312
        %v314 = vmul.f32 %v275, %v313
        %v315 = vadd.f32 %v311, %v314
        %s316 = sld [smem:[#allocation2 + $0x7]]
        %v317 = vstv %s316
        %v318 = vmul.f32 %v277, %v317
        %v319 = vadd.f32 %v315, %v318
        %s320 = sld [smem:[#allocation4 + $0x1]]
        %v321 = vstv %s320
        %v322 = vadd.f32 %v319, %v321
        %vm323 = vcmp.gt.f32.partialorder %v322, 0.0
        %v324 = vmul.f32 %v297, %v322
        %v325 = vsel %vm323, %v322, %v324
        %v326 = vsub.f32 %v325, %v300
        %v327 = vmul.f32 %v326, %v302
        %s328 = scalar_lea.vmem %s267, 2
        %329 = vst [vmem:[%s328] sm:$0x3] %v327
        %s330 = sld [smem:[#allocation2 + $0x8]]
        %v331 = vstv %s330
        %v332 = vmul.f32 %v271, %v331
        %s333 = sld [smem:[#allocation2 + $0x9]]
        %v334 = vstv %s333
        %v335 = vmul.f32 %v273, %v334
        %v336 = vadd.f32 %v332, %v335
        %s337 = sld [smem:[#allocation2 + $0xa]]
        %v338 = vstv %s337
        %v339 = vmul.f32 %v275, %v338
        %v340 = vadd.f32 %v336, %v339
        %s341 = sld [smem:[#allocation2 + $0xb]]
        %v342 = vstv %s341
        %v343 = vmul.f32 %v277, %v342
        %v344 = vadd.f32 %v340, %v343
        %s345 = sld [smem:[#allocation4 + $0x2]]
        %v346 = vstv %s345
        %v347 = vadd.f32 %v344, %v346
        %vm348 = vcmp.gt.f32.partialorder %v347, 0.0
        %v349 = vmul.f32 %v297, %v347
        %v350 = vsel %vm348, %v347, %v349
        %v351 = vsub.f32 %v350, %v300
        %v352 = vmul.f32 %v351, %v302
        %s353 = scalar_lea.vmem %s267, 4
        %354 = vst [vmem:[%s353] sm:$0x3] %v352
        %p355 = scmp.lt.s32.totalorder %s21, 1
        %s356 = scalar_select %p355, %s21, 1
        %p357 = scmp.lt.s32.totalorder %s22, 0
        %s358 = scalar_select %p357, %s22, 0
        %s359 = smul.addr %s356, 3
        %s360 = sadd.s32 %s358, %s359
        %s361 = smul.addr %s360, 2
        %s362 = scalar_lea.vmem %s4, %s361
        // Predicated region
        $region49: #{out_conv_forward.3} parent=35 // pred_check
          %p363 = pneg %p140
        $region50: #{out_conv_forward.3} parent=35 // pred_check_branch
          %365 = sbr.rel (%p363) target = $region52
        $region51: #{out_conv_forward.3} parent=35 // pred_region
          _
        $region52: #{out_conv_forward.3} parent=35 // pred_fallthru
          _
      $region36: #{out_conv_forward.3} parent=5 // pred_fallthru
        _
      %p366 = scmp.le.s32.totalorder 2, %s12
      // Predicated region
      $region53: #{out_conv_forward.3} parent=5 // pred_check
        %p367 = pneg %p366
      $region54: #{out_conv_forward.3} parent=5 // pred_check_branch
        %369 = sbr.rel (%p367) target = $region56
      $region55: #{out_conv_forward.3} parent=5 // pred_region
        %s370 = ssub.s32 %s12, 2
        // Predicated region
        $region57: #{out_conv_forward.3} parent=55 // pred_check
          %p371 = pneg %p146
        $region58: #{out_conv_forward.3} parent=55 // pred_check_branch
          %373 = sbr.rel (%p371) target = $region60
        $region59: #{out_conv_forward.3} parent=55 // pred_region
          %p374 = scmp.lt.s32.totalorder %s23, 1
          %s375 = scalar_select %p374, %s23, 1
          %p376 = scmp.lt.s32.totalorder %s24, 0
          %s377 = scalar_select %p376, %s24, 0
          %s378 = smul.addr %s375, 3
          %s379 = sadd.s32 %s377, %s378
          %s380 = smul.addr %s379, 2
          %s381 = scalar_lea.vmem %s4, %s380
        $region60: #{out_conv_forward.3} parent=55 // pred_fallthru
          _
      $region56: #{out_conv_forward.3} parent=5 // pred_fallthru
        _
    $region6: #{out_conv_forward.3} parent=1 // loop_footer
      %s16 = sadd.s32 1, %s12
    $region7: #{out_conv_forward.3} parent=1 // loop_footer_branch
      %11 = sbr.rel target = $region3
    $region8: #{out_conv_forward.3} parent=1 // loop_exit
      _
    %382 = vsyncpa [#allocation3], 1
    %s383 = scalar_lea.sflag [#allocation3], 1
    %384 = vsyncpa %s383, 1
    %385 = vsyncpa [#allocation5], 1

</llo_original>
